<compile_context>
chip_gen: v7x
topology: tpu7x:2x2x1
jax: 0.10.0
libtpu: 0.0.40
codegen_flags: <defaults>
</compile_context>

<pallas_src>
import math

import jax
import jax.numpy as jnp
import numpy as np
from jax.experimental import pallas as pl
from jax.experimental.pallas import tpu as pltpu

NUM_FREQ = 15
IN_DIM = 3
HALF = NUM_FREQ * IN_DIM          # 45
OUT_DIM = 2 * HALF                # 90
MAX_ROW_TILE = 2048               # rows per grid step (512-4096 is the sweet spot)


def _round_up(n, m):
    return ((n + m - 1) // m) * m


def _wide_pos_embed_kernel(freq_ref, x_ref, o_ref):
    # freq_ref: (1, 45) f32, freq_ref[0, j] = 2*pi*(j//3)
    # x_ref:    (T, 3)  f32
    # o_ref:    (T, 90) f32
    x = x_ref[...]
    # Replicate the 3 coordinates across the 15 frequency blocks on the lane axis
    # (single 15-way lane concat per tile), then one wide multiply:
    #   arg[:, 3*i + c] = 2*pi*i * x[:, c]
    x_rep = jnp.concatenate([x] * NUM_FREQ, axis=1)       # (T, 45)
    arg = x_rep * freq_ref[...]                           # broadcast (1, 45)
    # Two lane-dense transcendentals, stored directly into the output halves.
    o_ref[:, :HALF] = jnp.sin(arg)
    o_ref[:, HALF:] = jnp.cos(arg)


def wide_position_embedder(x):
    """x: (N, 3) float -> (N, 90) float32 Fourier-feature embedding."""
    assert x.ndim == 2 and x.shape[1] == IN_DIM
    n = x.shape[0]
    x = x.astype(jnp.float32)

    # Large row tile for throughput, but never larger than the (8-aligned) input.
    tile = min(MAX_ROW_TILE, _round_up(n, 8))
    n_pad = _round_up(n, tile)
    if n_pad != n:
        # TODO(synk): a ragged tail block would avoid this pad copy; cost is tiny.
        x = jnp.pad(x, ((0, n_pad - n), (0, 0)))

    # Frequency row (1, 45): freq[j] = float32(2*pi*(j//3)), rounded exactly like
    # the torch reference (python-float product rounded once to f32).
    freqs = np.array([2.0 * math.pi * i for i in range(NUM_FREQ)], dtype=np.float32)
    freq_row = jnp.asarray(np.repeat(freqs, IN_DIM)).reshape(1, HALF)

    out = pl.pallas_call(
        _wide_pos_embed_kernel,
        out_shape=jax.ShapeDtypeStruct((n_pad, OUT_DIM), jnp.float32),
        grid_spec=pltpu.PrefetchScalarGridSpec(
            num_scalar_prefetch=0,
            grid=(n_pad // tile,),
            in_specs=[
                pl.BlockSpec((1, HALF), lambda i: (0, 0)),       # frequency row (constant)
                pl.BlockSpec((tile, IN_DIM), lambda i: (i, 0)),  # x row tile
            ],
            out_specs=pl.BlockSpec((tile, OUT_DIM), lambda i: (i, 0)),
        ),
        compiler_params=pltpu.CompilerParams(
            dimension_semantics=("parallel",)),
    )(freq_row, x)

    return out[:n] if n_pad != n else out


def _reference(x):
    x = x.astype(jnp.float32)
    parts = [jnp.sin(2.0 * math.pi * i * x) for i in range(NUM_FREQ)] + \
            [jnp.cos(2.0 * math.pi * i * x) for i in range(NUM_FREQ)]
    return jnp.concatenate(parts, axis=1)


if __name__ == "__main__":
    key = jax.random.PRNGKey(0)
    k1, k2 = jax.random.split(key)

    # Small batch of 3-D positions (single-tile path).
    x_small = jax.random.uniform(k1, (16, IN_DIM), dtype=jnp.float32)
    out_small = jax.block_until_ready(wide_position_embedder(x_small))
    assert out_small.shape == (16, OUT_DIM), out_small.shape
    assert jnp.allclose(out_small, _reference(x_small), atol=1e-5, rtol=1e-5), \
        "mismatch vs reference (small)"

    # Ragged / multi-step grid path (exercises padding and tile > input rows logic).
    x_big = jax.random.uniform(k2, (2500, IN_DIM), dtype=jnp.float32)
    out_big = jax.block_until_ready(wide_position_embedder(x_big))
    assert out_big.shape == (2500, OUT_DIM), out_big.shape
    assert jnp.allclose(out_big, _reference(x_big), atol=1e-5, rtol=1e-5), \
        "mismatch vs reference (ragged)"

    print("KERNEL_OK")
</pallas_src>

<mosaic_0001>
module attributes {stable_mosaic.version = 11 : i64} {
  func.func @_wide_pos_embed_kernel(%arg0: i32, %arg1: memref<1x45xf32, #tpu.memory_space<vmem>>, %arg2: memref<16x3xf32, #tpu.memory_space<vmem>>, %arg3: memref<16x90xf32, #tpu.memory_space<vmem>>) attributes {dimension_semantics = [#tpu.dimension_semantics<parallel>], iteration_bounds = array<i64: 1>, scalar_prefetch = 0 : i64, scratch_operands = 0 : i64, tpu.core_type = #tpu.core_type<tc>, window_params = [{pipeline_mode = #tpu.pipeline_mode<synchronous>, transform_indices = @transform_0, window_bounds = array<i64: 1, 45>}, {transform_indices = @transform_1, window_bounds = array<i64: 16, 3>}, {transform_indices = @transform_2, window_bounds = array<i64: 16, 90>}]} {
    %c0 = arith.constant 0 : index
    %c0_0 = arith.constant 0 : index
    %0 = vector.load %arg2[%c0, %c0_0] : memref<16x3xf32, #tpu.memory_space<vmem>>, vector<16x3xf32>
    %1 = tpu.concatenate %0, %0, %0, %0, %0, %0, %0, %0, %0, %0, %0, %0, %0, %0, %0 in 1 : vector<16x3xf32>, vector<16x3xf32>, vector<16x3xf32>, vector<16x3xf32>, vector<16x3xf32>, vector<16x3xf32>, vector<16x3xf32>, vector<16x3xf32>, vector<16x3xf32>, vector<16x3xf32>, vector<16x3xf32>, vector<16x3xf32>, vector<16x3xf32>, vector<16x3xf32>, vector<16x3xf32> -> vector<16x45xf32>
    %c0_1 = arith.constant 0 : index
    %c0_2 = arith.constant 0 : index
    %2 = vector.load %arg1[%c0_1, %c0_2] : memref<1x45xf32, #tpu.memory_space<vmem>>, vector<1x45xf32>
    %3 = vector.broadcast %2 : vector<1x45xf32> to vector<16x45xf32>
    %4 = arith.mulf %1, %3 : vector<16x45xf32>
    %5 = math.sin %4 : vector<16x45xf32>
    %c0_3 = arith.constant 0 : index
    %c0_4 = arith.constant 0 : index
    %6 = vector.load %arg3[%c0_3, %c0_4] : memref<16x90xf32, #tpu.memory_space<vmem>>, vector<16x45xf32>
    tpu.vector_store %arg3[%c0_3, %c0_4], %5 {strides = array<i32>} : memref<16x90xf32, #tpu.memory_space<vmem>>, vector<16x45xf32>,
    %7 = math.cos %4 : vector<16x45xf32>
    %c0_5 = arith.constant 0 : index
    %c45 = arith.constant 45 : index
    %8 = vector.load %arg3[%c0_5, %c45] : memref<16x90xf32, #tpu.memory_space<vmem>>, vector<16x45xf32>
    tpu.vector_store %arg3[%c0_5, %c45], %7 {strides = array<i32>} : memref<16x90xf32, #tpu.memory_space<vmem>>, vector<16x45xf32>,
    return
  }
  func.func @transform_0(%arg0: i32) -> (i32, i32) {
    %c0_i32 = arith.constant 0 : i32
    %c0_i32_0 = arith.constant 0 : i32
    %c0_i32_1 = arith.constant 0 : i32
    return %c0_i32, %c0_i32_0 : i32, i32
  }
  func.func @transform_1(%arg0: i32) -> (i32, i32) {
    %c0_i32 = arith.constant 0 : i32
    %c0_i32_0 = arith.constant 0 : i32
    return %arg0, %c0_i32 : i32, i32
  }
  func.func @transform_2(%arg0: i32) -> (i32, i32) {
    %c0_i32 = arith.constant 0 : i32
    %c0_i32_0 = arith.constant 0 : i32
    return %arg0, %c0_i32 : i32, i32
  }
}

</mosaic_0001>

<llo_original>
// kernel: tpu_custom_call.1
$region0: #{tpu_custom_call.1}
  #allocation0 [shape = 'u32[]', space=smem, size = 0x4, offset = 0x4, fixed_abs, tag = 'smem constant byte address 0x4 - core index']
  #allocation1 [shape = 'u32[144,128]{1,0:T(1,128)}', space=vmem, size = 0x12000, scoped, tag = 'internal scratch']
  %s0 = inlined_call_operand.vmem [shape: f32[1,45], index: 0, kind: input, shape index: {}]
  %s1 = inlined_call_operand.vmem [shape: f32[16,3], index: 1, kind: input, shape index: {}]
  %s2 = inlined_call_operand.hbm [shape: f32[16,90], index: 2, kind: output, shape index: {}]
  %s3 = sld [smem:[#allocation0]]
  $region18: #{tpu_custom_call.1} parent=0
    _
  %s5 = ssub.s32 1, %s3
  %s6 = scalar_select 0, %s5, %s3
  $region1: #{tpu_custom_call.1} parent=0
    #allocation2 [shape = 'u8[8192]{0}', space=vmem, size = 0x2000, scoped, tag = 'output window, operand 0, single buffered']
    #allocation3 [shape = 's32[1]{0}', space=sflag, size = 0x4, scoped, tag = 'scoped memory for tpu_custom_call.1']
    %7 = vsyncpa [#allocation3], 0
    // Predicated region
    $region2: #{tpu_custom_call.1} parent=1 // pred_check
      _
    $region3: #{tpu_custom_call.1} parent=1 // pred_check_branch
      %9 = sbr.rel (0) target = $region5
    $region4: #{tpu_custom_call.1} parent=1 // pred_region
      _
    $region5: #{tpu_custom_call.1} parent=1 // pred_fallthru
      _
    // Predicated region
    $region6: #{tpu_custom_call.1} parent=1 // pred_check
      _
    $region7: #{tpu_custom_call.1} parent=1 // pred_check_branch
      %11 = sbr.rel (0) target = $region9
    $region8: #{tpu_custom_call.1} parent=1 // pred_region
      _
    $region9: #{tpu_custom_call.1} parent=1 // pred_fallthru
      _
    %v12 = vld [vmem:[%s1] sm:$0xff]
    %v13 = vld [vmem:[%s1 + $0x8] sm:$0xff]
    %16 = vrot.lane.b32.xlu0 %v12, 3
    %v17 = vpop.permute.xlu0 %16
    %18 = vrot.lane.b32.xlu0 %v13, 3
    %v19 = vpop.permute.xlu0 %18
    %22 = vrot.lane.b32.xlu0 %v12, 6
    %v23 = vpop.permute.xlu0 %22
    %24 = vrot.lane.b32.xlu0 %v13, 6
    %v25 = vpop.permute.xlu0 %24
    %28 = vrot.lane.b32.xlu0 %v12, 9
    %v29 = vpop.permute.xlu0 %28
    %30 = vrot.lane.b32.xlu0 %v13, 9
    %v31 = vpop.permute.xlu0 %30
    %34 = vrot.lane.b32.xlu0 %v12, 12
    %v35 = vpop.permute.xlu0 %34
    %36 = vrot.lane.b32.xlu0 %v13, 12
    %v37 = vpop.permute.xlu0 %36
    %40 = vrot.lane.b32.xlu0 %v12, 15
    %v41 = vpop.permute.xlu0 %40
    %42 = vrot.lane.b32.xlu0 %v13, 15
    %v43 = vpop.permute.xlu0 %42
    %46 = vrot.lane.b32.xlu0 %v12, 18
    %v47 = vpop.permute.xlu0 %46
    %48 = vrot.lane.b32.xlu0 %v13, 18
    %v49 = vpop.permute.xlu0 %48
    %52 = vrot.lane.b32.xlu0 %v12, 21
    %v53 = vpop.permute.xlu0 %52
    %54 = vrot.lane.b32.xlu0 %v13, 21
    %v55 = vpop.permute.xlu0 %54
    %58 = vrot.lane.b32.xlu0 %v12, 24
    %v59 = vpop.permute.xlu0 %58
    %60 = vrot.lane.b32.xlu0 %v13, 24
    %v61 = vpop.permute.xlu0 %60
    %64 = vrot.lane.b32.xlu0 %v12, 27
    %v65 = vpop.permute.xlu0 %64
    %66 = vrot.lane.b32.xlu0 %v13, 27
    %v67 = vpop.permute.xlu0 %66
    %70 = vrot.lane.b32.xlu0 %v12, 30
    %v71 = vpop.permute.xlu0 %70
    %72 = vrot.lane.b32.xlu0 %v13, 30
    %v73 = vpop.permute.xlu0 %72
    %76 = vrot.lane.b32.xlu0 %v12, 33
    %v77 = vpop.permute.xlu0 %76
    %78 = vrot.lane.b32.xlu0 %v13, 33
    %v79 = vpop.permute.xlu0 %78
    %82 = vrot.lane.b32.xlu0 %v12, 36
    %v83 = vpop.permute.xlu0 %82
    %84 = vrot.lane.b32.xlu0 %v13, 36
    %v85 = vpop.permute.xlu0 %84
    %88 = vrot.lane.b32.xlu0 %v12, 39
    %v89 = vpop.permute.xlu0 %88
    %90 = vrot.lane.b32.xlu0 %v13, 39
    %v91 = vpop.permute.xlu0 %90
    %94 = vrot.lane.b32.xlu0 %v12, 42
    %v95 = vpop.permute.xlu0 %94
    %96 = vrot.lane.b32.xlu0 %v13, 42
    %v97 = vpop.permute.xlu0 %96
    %vm100 = vcmask 23552
    %v101 = vsel %vm100, %v12, %v17
    %v102 = vsel %vm100, %v13, %v19
    %vm103 = vcmask 48128
    %v104 = vsel %vm103, %v101, %v23
    %v105 = vsel %vm103, %v102, %v25
    %vm106 = vcmask 72704
    %v107 = vsel %vm106, %v104, %v29
    %v108 = vsel %vm106, %v105, %v31
    %vm109 = vcmask 97280
    %v110 = vsel %vm109, %v107, %v35
    %v111 = vsel %vm109, %v108, %v37
    %vm112 = vcmask 121856
    %v113 = vsel %vm112, %v110, %v41
    %v114 = vsel %vm112, %v111, %v43
    %vm115 = vcmask 146432
    %v116 = vsel %vm115, %v113, %v47
    %v117 = vsel %vm115, %v114, %v49
    %vm118 = vcmask 171008
    %v119 = vsel %vm118, %v116, %v53
    %v120 = vsel %vm118, %v117, %v55
    %vm121 = vcmask 195584
    %v122 = vsel %vm121, %v119, %v59
    %v123 = vsel %vm121, %v120, %v61
    %vm124 = vcmask 220160
    %v125 = vsel %vm124, %v122, %v65
    %v126 = vsel %vm124, %v123, %v67
    %vm127 = vcmask 244736
    %v128 = vsel %vm127, %v125, %v71
    %v129 = vsel %vm127, %v126, %v73
    %vm130 = vcmask 269312
    %v131 = vsel %vm130, %v128, %v77
    %v132 = vsel %vm130, %v129, %v79
    %vm133 = vcmask 293888
    %v134 = vsel %vm133, %v131, %v83
    %v135 = vsel %vm133, %v132, %v85
    %vm136 = vcmask 318464
    %v137 = vsel %vm136, %v134, %v89
    %v138 = vsel %vm136, %v135, %v91
    %vm139 = vcmask 343040
    %v140 = vsel %vm139, %v137, %v95
    %v141 = vsel %vm139, %v138, %v97
    %v142 = vld [vmem:[%s0] sm:$0x1]
    %v144 = vlaneseq
    %v145 = vshrl.u32 %v144, 7
    %v146 = vsub.s32 0, %v145
    %v147 = vrot.slane %v142, %v146
    %v149 = vmul.f32 %v140, %v147
    %v150 = vmul.f32 %v141, %v147
    %v151 = vand.u32 2147483647, %v149
    %vm152 = vcmp.le.f32.partialorder %v151, 0.7853982
    %vm153 = vcmp.lt.s32.totalorder %v149, 0
    %v154 = vand.u32 %v149, 2139095040
    %v155 = vshrl.u32 %v154, 23
    %v156 = vsub.s32 %v155, 127
    %v157 = vand.u32 2147483647, %v149
    %v158 = vand.u32 %v157, 8388607
    %v159 = vor.u32 %v158, 8388608
    %v160 = vsub.s32 0, %v159
    %v161 = vadd.s32 %v156, 1
    %vm162 = vcmp.gt.s32.totalorder %v161, 0
    %v163 = vsel %vm162, %v161, 0
    %v164 = vshrl.u32 %v163, 5
    %v165 = vand.u32 %v163, 31
    %v166 = vsub.s32 32, %v165
    %v167 = vshrl.u32 683565275, %v166
    %v168 = vshll.u32 683565275, %v165
    %v169 = vshrl.u32 2475754826, %v166
    %v170 = vor.u32 %v168, %v169
    %v171 = vshll.u32 2475754826, %v165
    %v172 = vshrl.u32 2131351028, %v166
    %v173 = vor.u32 %v171, %v172
    %v174 = vshll.u32 2131351028, %v165
    %v175 = vshrl.u32 2102212464, %v166
    %v176 = vor.u32 %v174, %v175
    %v177 = vshll.u32 2102212464, %v165
    %v178 = vshrl.u32 920167782, %v166
    %v179 = vor.u32 %v177, %v178
    %v180 = vshll.u32 920167782, %v165
    %v181 = vshrl.u32 1326507024, %v166
    %v182 = vor.u32 %v180, %v181
    %vm183 = vcmp.lt.s32.totalorder %v164, 1
    %vm184 = vcmp.lt.s32.totalorder %v164, 2
    %vm185 = vcmp.lt.s32.totalorder %v164, 3
    %vm186 = vcmp.lt.s32.totalorder %v164, 4
    %v187 = vsel %vm183, %v167, %v170
    %v188 = vsel %vm186, %v176, 2102212464
    %v189 = vsel %vm185, %v173, %v188
    %v190 = vsel %vm184, %v187, %v189
    %v191 = vsel %vm183, %v170, %v173
    %v192 = vsel %vm186, %v179, 920167782
    %v193 = vsel %vm185, %v176, %v192
    %v194 = vsel %vm184, %v191, %v193
    %v195 = vsel %vm183, %v173, %v176
    %v196 = vsel %vm186, %v182, 1326507024
    %v197 = vsel %vm185, %v179, %v196
    %v198 = vsel %vm184, %v195, %v197
    %v199 = vshll.u32 %v159, 8
    %v200 = vmul.u32.u64.compose %v199, %v198
    %v201 = vextract.low.u32 %v200
    %v202 = vextract.high.u32 %v200
    %v203 = vmul.u32.u64.compose %v199, %v194
    %v204 = vextract.low.u32 %v203
    %v205 = vextract.high.u32 %v203
    %v206 = vmul.u32 %v199, %v190
    %v207 = vadd.s32 %v202, %v204
    %vm208 = vc.u32 %v202, %v204
    %v209 = vadd.s32 %v205, 1
    %v210 = vsel %vm208, %v209, %v205
    %v211 = vadd.s32 %v206, %v210
    %v212 = vadd.s32 %v211, 536870912
    %v213 = vshrl.u32 %v212, 30
    %v214 = vshll.u32 %v213, 30
    %v215 = vsub.s32 %v211, %v214
    %vm216 = vcmp.lt.s32.totalorder %v215, 0
    %v217 = vsub.s32 0, %v215
    %v218 = vsel %vm216, %v217, %v215
    %v219 = vclz %v218
    %v220 = vsub.s32 %v219, 2
    %vm221 = vcmp.gt.s32.totalorder 0, %v220
    %v222 = vsel %vm221, 0, %v220
    %v223 = vsub.s32 32, %v222
    %v224 = vshll.u32 %v215, %v222
    %v225 = vshrl.u32 %v207, %v223
    %v226 = vor.u32 %v224, %v225
    %v227 = vsub.s32 4294967266, %v222
    %v228 = vadd.s32 %v227, 127
    %v229 = vshll.u32 %v228, 23
    %v230 = vor.u32 4788187, %v229
    %v231 = vand.u32 2147483647, %v230
    %v233 = vcvt.s32.f32 %v226
    %v234 = vmul.f32 %v233, %v231
    %v235 = vxor.u32 %v234, 2147483648
    %v236 = vsel %vm153, %v235, %v234
    %v237 = vsub.s32 4, %v213
    %v238 = vsel %vm153, %v237, %v213
    %v239 = vsel %vm152, %v149, %v236
    %v240 = vsel %vm152, 0, %v238
    %v241 = vcosq.f32.pop %v239
    %v242 = vsinq.f32.pop %v239
    %vm243 = vweird.f32 %v149
    %v244 = vadd.s32 %v240, 3
    %v245 = vand.u32 %v244, 3
    %vm246 = vcmp.lt.s32.totalorder %v245, 2
    %vm247 = vcmp.eq.s32.totalorder %v245, 0
    %v248 = vxor.u32 %v242, 2147483648
    %v249 = vsel %vm247, %v241, %v248
    %vm250 = vcmp.eq.s32.totalorder %v245, 2
    %v251 = vxor.u32 %v241, 2147483648
    %v252 = vsel %vm250, %v251, %v242
    %v253 = vsel %vm246, %v249, %v252
    %v254 = vsel %vm243, nan, %v253
    %v255 = vand.u32 2147483647, %v150
    %vm256 = vcmp.le.f32.partialorder %v255, 0.7853982
    %vm257 = vcmp.lt.s32.totalorder %v150, 0
    %v258 = vand.u32 %v150, 2139095040
    %v259 = vshrl.u32 %v258, 23
    %v260 = vsub.s32 %v259, 127
    %v261 = vand.u32 2147483647, %v150
    %v262 = vand.u32 %v261, 8388607
    %v263 = vor.u32 %v262, 8388608
    %v264 = vsub.s32 0, %v263
    %v265 = vadd.s32 %v260, 1
    %vm266 = vcmp.gt.s32.totalorder %v265, 0
    %v267 = vsel %vm266, %v265, 0
    %v268 = vshrl.u32 %v267, 5
    %v269 = vand.u32 %v267, 31
    %v270 = vsub.s32 32, %v269
    %v271 = vshrl.u32 683565275, %v270
    %v272 = vshll.u32 683565275, %v269
    %v273 = vshrl.u32 2475754826, %v270
    %v274 = vor.u32 %v272, %v273
    %v275 = vshll.u32 2475754826, %v269
    %v276 = vshrl.u32 2131351028, %v270
    %v277 = vor.u32 %v275, %v276
    %v278 = vshll.u32 2131351028, %v269
    %v279 = vshrl.u32 2102212464, %v270
    %v280 = vor.u32 %v278, %v279
    %v281 = vshll.u32 2102212464, %v269
    %v282 = vshrl.u32 920167782, %v270
    %v283 = vor.u32 %v281, %v282
    %v284 = vshll.u32 920167782, %v269
    %v285 = vshrl.u32 1326507024, %v270
    %v286 = vor.u32 %v284, %v285
    %vm287 = vcmp.lt.s32.totalorder %v268, 1
    %vm288 = vcmp.lt.s32.totalorder %v268, 2
    %vm289 = vcmp.lt.s32.totalorder %v268, 3
    %vm290 = vcmp.lt.s32.totalorder %v268, 4
    %v291 = vsel %vm287, %v271, %v274
    %v292 = vsel %vm290, %v280, 2102212464
    %v293 = vsel %vm289, %v277, %v292
    %v294 = vsel %vm288, %v291, %v293
    %v295 = vsel %vm287, %v274, %v277
    %v296 = vsel %vm290, %v283, 920167782
    %v297 = vsel %vm289, %v280, %v296
    %v298 = vsel %vm288, %v295, %v297
    %v299 = vsel %vm287, %v277, %v280
    %v300 = vsel %vm290, %v286, 1326507024
    %v301 = vsel %vm289, %v283, %v300
    %v302 = vsel %vm288, %v299, %v301
    %v303 = vshll.u32 %v263, 8
    %v304 = vmul.u32.u64.compose %v303, %v302
    %v305 = vextract.low.u32 %v304
    %v306 = vextract.high.u32 %v304
    %v307 = vmul.u32.u64.compose %v303, %v298
    %v308 = vextract.low.u32 %v307
    %v309 = vextract.high.u32 %v307
    %v310 = vmul.u32 %v303, %v294
    %v311 = vadd.s32 %v306, %v308
    %vm312 = vc.u32 %v306, %v308
    %v313 = vadd.s32 %v309, 1
    %v314 = vsel %vm312, %v313, %v309
    %v315 = vadd.s32 %v310, %v314
    %v316 = vadd.s32 %v315, 536870912
    %v317 = vshrl.u32 %v316, 30
    %v318 = vshll.u32 %v317, 30
    %v319 = vsub.s32 %v315, %v318
    %vm320 = vcmp.lt.s32.totalorder %v319, 0
    %v321 = vsub.s32 0, %v319
    %v322 = vsel %vm320, %v321, %v319
    %v323 = vclz %v322
    %v324 = vsub.s32 %v323, 2
    %vm325 = vcmp.gt.s32.totalorder 0, %v324
    %v326 = vsel %vm325, 0, %v324
    %v327 = vsub.s32 32, %v326
    %v328 = vshll.u32 %v319, %v326
    %v329 = vshrl.u32 %v311, %v327
    %v330 = vor.u32 %v328, %v329
    %v331 = vsub.s32 4294967266, %v326
    %v332 = vadd.s32 %v331, 127
    %v333 = vshll.u32 %v332, 23
    %v334 = vor.u32 4788187, %v333
    %v335 = vand.u32 2147483647, %v334
    %v337 = vcvt.s32.f32 %v330
    %v338 = vmul.f32 %v337, %v335
    %v339 = vxor.u32 %v338, 2147483648
    %v340 = vsel %vm257, %v339, %v338
    %v341 = vsub.s32 4, %v317
    %v342 = vsel %vm257, %v341, %v317
    %v343 = vsel %vm256, %v150, %v340
    %v344 = vsel %vm256, 0, %v342
    %v345 = vcosq.f32.pop %v343
    %v346 = vsinq.f32.pop %v343
    %vm347 = vweird.f32 %v150
    %v348 = vadd.s32 %v344, 3
    %v349 = vand.u32 %v348, 3
    %vm350 = vcmp.lt.s32.totalorder %v349, 2
    %vm351 = vcmp.eq.s32.totalorder %v349, 0
    %v352 = vxor.u32 %v346, 2147483648
    %v353 = vsel %vm351, %v345, %v352
    %vm354 = vcmp.eq.s32.totalorder %v349, 2
    %v355 = vxor.u32 %v345, 2147483648
    %v356 = vsel %vm354, %v355, %v346
    %v357 = vsel %vm350, %v353, %v356
    %v358 = vsel %vm347, nan, %v357
    %vm359 = vcmask 367616
    %360 = vst.msk [vmem:[#allocation2] sm:$0xff] %vm359, %v254
    %361 = vst.msk [vmem:[#allocation2 + $0x8] sm:$0xff] %vm359, %v358
    %v362 = vand.u32 2147483647, %v149
    %vm363 = vcmp.le.f32.partialorder %v362, 0.7853982
    %vm364 = vcmp.lt.s32.totalorder %v149, 0
    %v365 = vand.u32 %v149, 2139095040
    %v366 = vshrl.u32 %v365, 23
    %v367 = vsub.s32 %v366, 127
    %v368 = vand.u32 2147483647, %v149
    %v369 = vand.u32 %v368, 8388607
    %v370 = vor.u32 %v369, 8388608
    %v371 = vsub.s32 0, %v370
    %v372 = vadd.s32 %v367, 1
    %vm373 = vcmp.gt.s32.totalorder %v372, 0
    %v374 = vsel %vm373, %v372, 0
    %v375 = vshrl.u32 %v374, 5
    %v376 = vand.u32 %v374, 31
    %v377 = vsub.s32 32, %v376
    %v378 = vshrl.u32 683565275, %v377
    %v379 = vshll.u32 683565275, %v376
    %v380 = vshrl.u32 2475754826, %v377
    %v381 = vor.u32 %v379, %v380
    %v382 = vshll.u32 2475754826, %v376
    %v383 = vshrl.u32 2131351028, %v377
    %v384 = vor.u32 %v382, %v383
    %v385 = vshll.u32 2131351028, %v376
    %v386 = vshrl.u32 2102212464, %v377
    %v387 = vor.u32 %v385, %v386
    %v388 = vshll.u32 2102212464, %v376
    %v389 = vshrl.u32 920167782, %v377
    %v390 = vor.u32 %v388, %v389
    %v391 = vshll.u32 920167782, %v376
    %v392 = vshrl.u32 1326507024, %v377
    %v393 = vor.u32 %v391, %v392
    %vm394 = vcmp.lt.s32.totalorder %v375, 1
    %vm395 = vcmp.lt.s32.totalorder %v375, 2
    %vm396 = vcmp.lt.s32.totalorder %v375, 3
    %vm397 = vcmp.lt.s32.totalorder %v375, 4
    %v398 = vsel %vm394, %v378, %v381
    %v399 = vsel %vm397, %v387, 2102212464
    %v400 = vsel %vm396, %v384, %v399
    %v401 = vsel %vm395, %v398, %v400
    %v402 = vsel %vm394, %v381, %v384
    %v403 = vsel %vm397, %v390, 920167782
    %v404 = vsel %vm396, %v387, %v403
    %v405 = vsel %vm395, %v402, %v404
    %v406 = vsel %vm394, %v384, %v387
    %v407 = vsel %vm397, %v393, 1326507024
    %v408 = vsel %vm396, %v390, %v407
    %v409 = vsel %vm395, %v406, %v408
    %v410 = vshll.u32 %v370, 8
    %v411 = vmul.u32.u64.compose %v410, %v409
    %v412 = vextract.low.u32 %v411
    %v413 = vextract.high.u32 %v411
    %v414 = vmul.u32.u64.compose %v410, %v405
    %v415 = vextract.low.u32 %v414
    %v416 = vextract.high.u32 %v414
    %v417 = vmul.u32 %v410, %v401
    %v418 = vadd.s32 %v413, %v415
    %vm419 = vc.u32 %v413, %v415
    %v420 = vadd.s32 %v416, 1
    %v421 = vsel %vm419, %v420, %v416
    %v422 = vadd.s32 %v417, %v421
    %v423 = vadd.s32 %v422, 536870912
    %v424 = vshrl.u32 %v423, 30
    %v425 = vshll.u32 %v424, 30
    %v426 = vsub.s32 %v422, %v425
    %vm427 = vcmp.lt.s32.totalorder %v426, 0
    %v428 = vsub.s32 0, %v426
    %v429 = vsel %vm427, %v428, %v426
    %v430 = vclz %v429
    %v431 = vsub.s32 %v430, 2
    %vm432 = vcmp.gt.s32.totalorder 0, %v431
    %v433 = vsel %vm432, 0, %v431
    %v434 = vsub.s32 32, %v433
    %v435 = vshll.u32 %v426, %v433
    %v436 = vshrl.u32 %v418, %v434
    %v437 = vor.u32 %v435, %v436
    %v438 = vsub.s32 4294967266, %v433
    %v439 = vadd.s32 %v438, 127
    %v440 = vshll.u32 %v439, 23
    %v441 = vor.u32 4788187, %v440
    %v442 = vand.u32 2147483647, %v441
    %v444 = vcvt.s32.f32 %v437
    %v445 = vmul.f32 %v444, %v442
    %v446 = vxor.u32 %v445, 2147483648
    %v447 = vsel %vm364, %v446, %v445
    %v448 = vsub.s32 4, %v424
    %v449 = vsel %vm364, %v448, %v424
    %v450 = vsel %vm363, %v149, %v447
    %v451 = vsel %vm363, 0, %v449
    %v452 = vcosq.f32.pop %v450
    %v453 = vsinq.f32.pop %v450
    %vm454 = vweird.f32 %v149
    %v455 = vand.u32 %v451, 3
    %vm456 = vcmp.lt.s32.totalorder %v455, 2
    %vm457 = vcmp.eq.s32.totalorder %v455, 0
    %v458 = vxor.u32 %v453, 2147483648
    %v459 = vsel %vm457, %v452, %v458
    %vm460 = vcmp.eq.s32.totalorder %v455, 2
    %v461 = vxor.u32 %v452, 2147483648
    %v462 = vsel %vm460, %v461, %v453
    %v463 = vsel %vm456, %v459, %v462
    %v464 = vsel %vm454, nan, %v463
    %v465 = vand.u32 2147483647, %v150
    %vm466 = vcmp.le.f32.partialorder %v465, 0.7853982
    %vm467 = vcmp.lt.s32.totalorder %v150, 0
    %v468 = vand.u32 %v150, 2139095040
    %v469 = vshrl.u32 %v468, 23
    %v470 = vsub.s32 %v469, 127
    %v471 = vand.u32 2147483647, %v150
    %v472 = vand.u32 %v471, 8388607
    %v473 = vor.u32 %v472, 8388608
    %v474 = vsub.s32 0, %v473
    %v475 = vadd.s32 %v470, 1
    %vm476 = vcmp.gt.s32.totalorder %v475, 0
    %v477 = vsel %vm476, %v475, 0
    %v478 = vshrl.u32 %v477, 5
    %v479 = vand.u32 %v477, 31
    %v480 = vsub.s32 32, %v479
    %v481 = vshrl.u32 683565275, %v480
    %v482 = vshll.u32 683565275, %v479
    %v483 = vshrl.u32 2475754826, %v480
    %v484 = vor.u32 %v482, %v483
    %v485 = vshll.u32 2475754826, %v479
    %v486 = vshrl.u32 2131351028, %v480
    %v487 = vor.u32 %v485, %v486
    %v488 = vshll.u32 2131351028, %v479
    %v489 = vshrl.u32 2102212464, %v480
    %v490 = vor.u32 %v488, %v489
    %v491 = vshll.u32 2102212464, %v479
    %v492 = vshrl.u32 920167782, %v480
    %v493 = vor.u32 %v491, %v492
    %v494 = vshll.u32 920167782, %v479
    %v495 = vshrl.u32 1326507024, %v480
    %v496 = vor.u32 %v494, %v495
    %vm497 = vcmp.lt.s32.totalorder %v478, 1
    %vm498 = vcmp.lt.s32.totalorder %v478, 2
    %vm499 = vcmp.lt.s32.totalorder %v478, 3
    %vm500 = vcmp.lt.s32.totalorder %v478, 4
    %v501 = vsel %vm497, %v481, %v484
    %v502 = vsel %vm500, %v490, 2102212464
    %v503 = vsel %vm499, %v487, %v502
    %v504 = vsel %vm498, %v501, %v503
    %v505 = vsel %vm497, %v484, %v487
    %v506 = vsel %vm500, %v493, 920167782
    %v507 = vsel %vm499, %v490, %v506
    %v508 = vsel %vm498, %v505, %v507
    %v509 = vsel %vm497, %v487, %v490
    %v510 = vsel %vm500, %v496, 1326507024
    %v511 = vsel %vm499, %v493, %v510
    %v512 = vsel %vm498, %v509, %v511
    %v513 = vshll.u32 %v473, 8
    %v514 = vmul.u32.u64.compose %v513, %v512
    %v515 = vextract.low.u32 %v514
    %v516 = vextract.high.u32 %v514
    %v517 = vmul.u32.u64.compose %v513, %v508
    %v518 = vextract.low.u32 %v517
    %v519 = vextract.high.u32 %v517
    %v520 = vmul.u32 %v513, %v504
    %v521 = vadd.s32 %v516, %v518
    %vm522 = vc.u32 %v516, %v518
    %v523 = vadd.s32 %v519, 1
    %v524 = vsel %vm522, %v523, %v519
    %v525 = vadd.s32 %v520, %v524
    %v526 = vadd.s32 %v525, 536870912
    %v527 = vshrl.u32 %v526, 30
    %v528 = vshll.u32 %v527, 30
    %v529 = vsub.s32 %v525, %v528
    %vm530 = vcmp.lt.s32.totalorder %v529, 0
    %v531 = vsub.s32 0, %v529
    %v532 = vsel %vm530, %v531, %v529
    %v533 = vclz %v532
    %v534 = vsub.s32 %v533, 2
    %vm535 = vcmp.gt.s32.totalorder 0, %v534
    %v536 = vsel %vm535, 0, %v534
    %v537 = vsub.s32 32, %v536
    %v538 = vshll.u32 %v529, %v536
    %v539 = vshrl.u32 %v521, %v537
    %v540 = vor.u32 %v538, %v539
    %v541 = vsub.s32 4294967266, %v536
    %v542 = vadd.s32 %v541, 127
    %v543 = vshll.u32 %v542, 23
    %v544 = vor.u32 4788187, %v543
    %v545 = vand.u32 2147483647, %v544
    %v547 = vcvt.s32.f32 %v540
    %v548 = vmul.f32 %v547, %v545
    %v549 = vxor.u32 %v548, 2147483648
    %v550 = vsel %vm467, %v549, %v548
    %v551 = vsub.s32 4, %v527
    %v552 = vsel %vm467, %v551, %v527
    %v553 = vsel %vm466, %v150, %v550
    %v554 = vsel %vm466, 0, %v552
    %v555 = vcosq.f32.pop %v553
    %v556 = vsinq.f32.pop %v553
    %vm557 = vweird.f32 %v150
    %v558 = vand.u32 %v554, 3
    %vm559 = vcmp.lt.s32.totalorder %v558, 2
    %vm560 = vcmp.eq.s32.totalorder %v558, 0
    %v561 = vxor.u32 %v556, 2147483648
    %v562 = vsel %vm560, %v555, %v561
    %vm563 = vcmp.eq.s32.totalorder %v558, 2
    %v564 = vxor.u32 %v555, 2147483648
    %v565 = vsel %vm563, %v564, %v556
    %v566 = vsel %vm559, %v562, %v565
    %v567 = vsel %vm557, nan, %v566
    %570 = vrot.lane.b32.xlu0 %v464, 45
    %v571 = vpop.permute.xlu0 %570
    %572 = vrot.lane.b32.xlu0 %v567, 45
    %v573 = vpop.permute.xlu0 %572
    %vm576 = vcmask 736616
    %577 = vst.msk [vmem:[#allocation2] sm:$0xff] %vm576, %v571
    %578 = vst.msk [vmem:[#allocation2 + $0x8] sm:$0xff] %vm576, %v573
    // Predicated region
    $region10: #{tpu_custom_call.1} parent=1 // pred_check
      _
    $region11: #{tpu_custom_call.1} parent=1 // pred_check_branch
      %580 = sbr.rel (0) target = $region13
    $region12: #{tpu_custom_call.1} parent=1 // pred_region
      %s582 = ssub.s32 256, 256
      %583 = vsyncadd [#allocation3], %s582
      %s584 = sshll.u32 [#allocation2], 4
      %s585 = int_to_ptr.vmem [resolvable:$true] %s584
      %590 = dma.vmem_to_hbm [thread:$0]  %s585, 256, %s2, [#allocation3], 128, 128, 8
    $region13: #{tpu_custom_call.1} parent=1 // pred_fallthru
      _
    // Predicated region
    $region14: #{tpu_custom_call.1} parent=1 // pred_check
      _
    $region15: #{tpu_custom_call.1} parent=1 // pred_check_branch
      %592 = sbr.rel (0) target = $region17
    $region16: #{tpu_custom_call.1} parent=1 // pred_region
      %593 = dma.done [#allocation3], 256
    $region17: #{tpu_custom_call.1} parent=1 // pred_fallthru
      _
    %594 = vsyncpa [#allocation3], 1

</llo_original>
